<compile_context>
chip_gen: v5e
topology: v5e:2x2
jax: 0.10.0
libtpu: 0.0.40
codegen_flags: <defaults>
</compile_context>

<pallas_src>
import functools

import jax
import jax.numpy as jnp
from jax.experimental import pallas as pl
from jax.experimental.pallas import tpu as pltpu


_LANES = 128
_MAX_TILE = 32768              # caps the unrolled lane-fold / compile time
_TILE_VMEM_BUDGET = 20 << 20   # bytes assumed usable for inputs + f32 temps


def _refined_reciprocal(d):
    # EUP vrcp estimate + one Newton-Raphson step (~2^-24 rel. error): plenty
    # for a loss, keeps the divide off the VPU hot path.
    r = pl.reciprocal(d, approx=True)
    return r * (2.0 - d * r)


def _lane_fold(x, tile):
    """(C, tile) -> (C, 128): sum 128-lane column groups with VPU adds only.

    Slices at 128-lane boundaries are vreg-column selections (no relayout);
    the pairwise tree keeps the add dependency chain short.  The cross-lane
    (XLU) reduce is deferred to the final grid step.
    """
    parts = [x[:, j * _LANES:(j + 1) * _LANES] for j in range(tile // _LANES)]
    while len(parts) > 1:
        merged = [parts[2 * i] + parts[2 * i + 1] for i in range(len(parts) // 2)]
        if len(parts) % 2:
            merged.append(parts[-1])
        parts = merged
    return parts[0]


def _dice_kernel(x_ref, t_ref, o_ref, inter_acc, isum_acc, tsum_acc,
                 *, smooth, n_classes, tile, hw_valid):
    hw_idx = pl.program_id(1)
    n_hw = pl.num_programs(1)

    @pl.when(hw_idx == 0)
    def _():
        inter_acc[...] = jnp.zeros_like(inter_acc)
        isum_acc[...] = jnp.zeros_like(isum_acc)
        tsum_acc[...] = jnp.zeros_like(tsum_acc)

    # Softmax over the channel axis (dim=1 of the NCHW module == axis 0 here).
    # TODO(synk): a bf16 elementwise path (f32 accumulation only) would ~halve
    # VPU/EUP work on v6e/v7x; kept f32 here for v5e and exactness.
    x = x_ref[...].astype(jnp.float32)              # (C, TILE) logits
    labels = t_ref[...]                             # (1, TILE) int32 labels
    m = jnp.max(x, axis=0, keepdims=True)
    e = jnp.exp(x - m)
    p = e * _refined_reciprocal(jnp.sum(e, axis=0, keepdims=True))   # (C, TILE)

    # One-hot membership via iota compare (no materialized one-hot tensor).
    ch = jax.lax.broadcasted_iota(jnp.int32, (n_classes, tile), 0)
    match = ch == labels                            # (C, TILE) bool

    def accumulate(p_, match_):
        inter_acc[...] += _lane_fold(jnp.where(match_, p_, 0.0), tile)
        isum_acc[...] += _lane_fold(p_, tile)
        tsum_acc[...] += _lane_fold(match_.astype(jnp.float32), tile)

    if hw_valid % tile != 0:
        # Trailing block is partial: its out-of-bounds lanes are undefined
        # (inputs are NOT host-padded), so mask -- but only on the last tile.
        @pl.when(hw_idx != n_hw - 1)
        def _():
            accumulate(p, match)

        @pl.when(hw_idx == n_hw - 1)
        def _():
            col = hw_idx * tile + jax.lax.broadcasted_iota(
                jnp.int32, (1, tile), 1)
            valid = col < hw_valid                  # (1, TILE) lane mask
            accumulate(jnp.where(valid, p, 0.0), jnp.logical_and(match, valid))
    else:
        accumulate(p, match)

    @pl.when(hw_idx == n_hw - 1)
    def _():
        # Single cross-lane reduce of the (C, 128) accumulators, then the dice
        # ratio on tiny (C, 1) operands (exact division is negligible here).
        inter = jnp.sum(inter_acc[...], axis=1, keepdims=True)
        isum = jnp.sum(isum_acc[...], axis=1, keepdims=True)
        tsum = jnp.sum(tsum_acc[...], axis=1, keepdims=True)
        dice = (2.0 * inter + smooth) / (isum + tsum + smooth)
        dice_sum = jnp.sum(dice, axis=0, keepdims=True)               # (1, 1)
        o_ref[...] = jnp.broadcast_to(dice_sum, o_ref.shape).astype(o_ref.dtype)


def _auto_tile(n_classes, logit_itemsize, hw):
    # Size the lane tile so double-buffered inputs plus ~10 f32-sized (C, tile)
    # temporaries fit a conservative VMEM budget (v7x has only 64 MiB physical,
    # 32 MiB default-scoped VMEM per TensorCore).
    per_lane = 2 * (n_classes * logit_itemsize + 4) + 10 * n_classes * 4
    t = _TILE_VMEM_BUDGET // per_lane
    t = max(_LANES, (t // _LANES) * _LANES)
    return int(min(t, _MAX_TILE, pl.cdiv(hw, _LANES) * _LANES))


def dice_loss_pallas(logits, labels, smooth=1.0, reduce="mean",
                     detail=False, tile=None):
    """logits: (N, C, H, W) float (any dtype); labels: (N, H, W) int.

    Matches DiceLoss.forward:
      detail=True     -> per-sample vector  C - sum_c dice
      reduce='mean'   -> mean_n (C - sum_c dice)
      reduce='sum'    -> N - sum_{n,c} dice
    """
    N, C, H, W = logits.shape
    HW = H * W
    itemsize = jnp.dtype(logits.dtype).itemsize

    if tile is None:
        tile = _auto_tile(C, itemsize, HW)
    assert tile % _LANES == 0, "spatial tile must be a multiple of 128 lanes"
    num_hw = pl.cdiv(HW, tile)

    # Stream logits in their native dtype (bf16 stays bf16 in HBM); the f32
    # cast happens in-kernel.  No host-side padding: the trailing partial
    # spatial block is masked inside the kernel, on the last tile only.
    x = logits.reshape(N, C, HW)
    # TODO(synk): labels could be narrowed to int8 in HBM for a further small
    # bandwidth win; kept int32 for robust Mosaic lowering of the (1, TILE) tile.
    t = labels.reshape(N, 1, HW).astype(jnp.int32)

    kernel = functools.partial(
        _dice_kernel, smooth=float(smooth), n_classes=C, tile=tile, hw_valid=HW)

    # Explicit VMEM budget: double-buffered inputs + a generous allowance for
    # the f32 elementwise temporaries (kept well under v7x's 64 MiB physical).
    vmem_limit = (2 * (C * itemsize + 4) + 14 * C * 4) * tile + (4 << 20)
    vmem_limit = int(min(max(vmem_limit, 16 << 20), 40 << 20))

    cost = pl.CostEstimate(
        flops=10 * N * C * HW,
        transcendentals=N * C * HW,
        bytes_accessed=N * C * HW * itemsize + N * HW * 4 + N * 128 * 4,
    )

    out = pl.pallas_call(
        kernel,
        out_shape=jax.ShapeDtypeStruct((1, N * 128), jnp.float32),
        grid_spec=pltpu.PrefetchScalarGridSpec(
            num_scalar_prefetch=0,
            grid=(N, num_hw),
            in_specs=[
                pl.BlockSpec((pl.Squeezed(), C, tile), lambda n, h: (n, 0, h)),
                pl.BlockSpec((pl.Squeezed(), 1, tile), lambda n, h: (n, 0, h)),
            ],
            out_specs=pl.BlockSpec((1, 128), lambda n, h: (0, n)),
            scratch_shapes=[
                pltpu.VMEM((C, 128), jnp.float32),   # intersection partials
                pltpu.VMEM((C, 128), jnp.float32),   # softmax-prob sum partials
                pltpu.VMEM((C, 128), jnp.float32),   # one-hot (target) partials
            ],
        ),
        compiler_params=pltpu.CompilerParams(
            dimension_semantics=("parallel", "arbitrary"),
            vmem_limit_bytes=vmem_limit,
        ),
        cost_estimate=cost,
    )(x, t)
    # TODO(synk): for N==1 on v7x, splitting the spatial axis across the two
    # TensorCores (extra "parallel" grid axis + partial accumulator outputs)
    # would recover the idle core; omitted to keep one accumulator path.

    dice_sums = out.reshape(N, 128)[:, 0]          # sum_c dice, per sample
    per_sample = C * 1.0 - dice_sums
    if detail:
        return per_sample
    if reduce == "mean":
        return jnp.mean(per_sample)
    elif reduce == "sum":
        return N - jnp.sum(dice_sums)
    raise ValueError(f"unsupported reduce mode: {reduce!r}")


def dice_loss_ref(logits, labels, smooth=1.0, reduce="mean", detail=False):
    """Pure-JAX reference mirroring the PyTorch forward (for verification)."""
    N, C, H, W = logits.shape
    p = jax.nn.softmax(logits.astype(jnp.float32), axis=1).reshape(N, C, -1)
    one_hot = jax.nn.one_hot(labels.reshape(N, -1), C, axis=1, dtype=jnp.float32)
    inter = jnp.sum(p * one_hot, axis=2)
    dice = (2.0 * inter + smooth) / (
        jnp.sum(p, axis=2) + jnp.sum(one_hot, axis=2) + smooth)
    if detail:
        return C * 1.0 - jnp.sum(dice, axis=1)
    if reduce == "mean":
        return jnp.mean(C * 1.0 - jnp.sum(dice, axis=1))
    return N - jnp.sum(dice)


if __name__ == "__main__":
    key = jax.random.PRNGKey(0)
    k1, k2 = jax.random.split(key)

    # Main check: small NCHW logits + integer labels, mean reduction.
    N, C, H, W = 2, 4, 16, 16
    logits = jax.random.normal(k1, (N, C, H, W), dtype=jnp.float32)
    labels = jax.random.randint(k2, (N, H, W), 0, C, dtype=jnp.int32)

    loss = jax.block_until_ready(
        dice_loss_pallas(logits, labels, smooth=1.0, reduce="mean"))
    ref = dice_loss_ref(logits, labels, smooth=1.0, reduce="mean")
    assert jnp.allclose(loss, ref, rtol=1e-4, atol=1e-4), (loss, ref)

    # detail=True path (per-sample vector) on the same inputs.
    det = jax.block_until_ready(
        dice_loss_pallas(logits, labels, smooth=1.0, detail=True))
    det_ref = dice_loss_ref(logits, labels, smooth=1.0, detail=True)
    assert jnp.allclose(det, det_ref, rtol=1e-4, atol=1e-4), (det, det_ref)

    # Secondary check: bf16 logits, non-128-multiple spatial size (un-padded
    # trailing partial block + in-kernel mask on the last tile only), small
    # tile to exercise multi-tile accumulation, 'sum' reduction.
    H2, W2 = 20, 20
    logits2 = jax.random.normal(k1, (N, C, H2, W2), dtype=jnp.bfloat16)
    labels2 = jax.random.randint(k2, (N, H2, W2), 0, C, dtype=jnp.int32)
    loss2 = jax.block_until_ready(
        dice_loss_pallas(logits2, labels2, smooth=1.0, reduce="sum", tile=128))
    ref2 = dice_loss_ref(logits2, labels2, smooth=1.0, reduce="sum")
    assert jnp.allclose(loss2, ref2, rtol=1e-3, atol=1e-3), (loss2, ref2)

    print("KERNEL_OK")
</pallas_src>

<mosaic_0001>
module attributes {stable_mosaic.version = 11 : i64} {
  func.func @_dice_kernel(%arg0: i32, %arg1: i32, %arg2: memref<1x4x256xf32, #tpu.memory_space<vmem>>, %arg3: memref<1x1x256xi32, #tpu.memory_space<vmem>>, %arg4: memref<1x128xf32, #tpu.memory_space<vmem>>, %arg5: memref<4x128xf32, #tpu.memory_space<vmem>>, %arg6: memref<4x128xf32, #tpu.memory_space<vmem>>, %arg7: memref<4x128xf32, #tpu.memory_space<vmem>>) attributes {dimension_semantics = [#tpu.dimension_semantics<parallel>, #tpu.dimension_semantics<arbitrary>], iteration_bounds = array<i64: 2, 1>, scalar_prefetch = 0 : i64, scratch_operands = 3 : i64, tpu.core_type = #tpu.core_type<tc>, window_params = [{transform_indices = @transform_0, window_bounds = array<i64: 1, 4, 256>}, {transform_indices = @transform_1, window_bounds = array<i64: 1, 1, 256>}, {transform_indices = @transform_2, window_bounds = array<i64: 1, 128>}]} {
    %c0_i32 = arith.constant 0 : i32
    %0 = arith.cmpi eq, %arg1, %c0_i32 : i32
    %1 = arith.extui %0 : i1 to i32
    %c0_i32_0 = arith.constant 0 : i32
    %2 = arith.cmpi ne, %1, %c0_i32_0 : i32
    scf.if %2 {
      %cst_23 = arith.constant 0.000000e+00 : f32
      %49 = vector.broadcast %cst_23 : f32 to vector<4x128xf32>
      %c0_24 = arith.constant 0 : index
      %c0_25 = arith.constant 0 : index
      %50 = vector.load %arg5[%c0_24, %c0_25] : memref<4x128xf32, #tpu.memory_space<vmem>>, vector<4x128xf32>
      tpu.vector_store %arg5[%c0_24, %c0_25], %49 {strides = array<i32>} : memref<4x128xf32, #tpu.memory_space<vmem>>, vector<4x128xf32>,
      %cst_26 = arith.constant 0.000000e+00 : f32
      %51 = vector.broadcast %cst_26 : f32 to vector<4x128xf32>
      %c0_27 = arith.constant 0 : index
      %c0_28 = arith.constant 0 : index
      %52 = vector.load %arg6[%c0_27, %c0_28] : memref<4x128xf32, #tpu.memory_space<vmem>>, vector<4x128xf32>
      tpu.vector_store %arg6[%c0_27, %c0_28], %51 {strides = array<i32>} : memref<4x128xf32, #tpu.memory_space<vmem>>, vector<4x128xf32>,
      %cst_29 = arith.constant 0.000000e+00 : f32
      %53 = vector.broadcast %cst_29 : f32 to vector<4x128xf32>
      %c0_30 = arith.constant 0 : index
      %c0_31 = arith.constant 0 : index
      %54 = vector.load %arg7[%c0_30, %c0_31] : memref<4x128xf32, #tpu.memory_space<vmem>>, vector<4x128xf32>
      tpu.vector_store %arg7[%c0_30, %c0_31], %53 {strides = array<i32>} : memref<4x128xf32, #tpu.memory_space<vmem>>, vector<4x128xf32>,
    } else {
    }
    %c0 = arith.constant 0 : index
    %c0_1 = arith.constant 0 : index
    %c0_2 = arith.constant 0 : index
    %3 = vector.load %arg2[%c0, %c0_1, %c0_2] : memref<1x4x256xf32, #tpu.memory_space<vmem>>, vector<1x4x256xf32>
    %4 = vector.shape_cast %3 : vector<1x4x256xf32> to vector<4x256xf32>
    %c0_3 = arith.constant 0 : index
    %c0_4 = arith.constant 0 : index
    %c0_5 = arith.constant 0 : index
    %5 = vector.load %arg3[%c0_3, %c0_4, %c0_5] : memref<1x1x256xi32, #tpu.memory_space<vmem>>, vector<1x1x256xi32>
    %6 = vector.shape_cast %5 : vector<1x1x256xi32> to vector<1x256xi32>
    %cst = arith.constant dense<0xFF800000> : vector<256xf32>
    %7 = vector.multi_reduction <maximumf>, %4, %cst [0] : vector<4x256xf32> to vector<256xf32>
    %8 = vector.shape_cast %7 : vector<256xf32> to vector<1x256xf32>
    %9 = vector.broadcast %8 : vector<1x256xf32> to vector<4x256xf32>
    %10 = arith.subf %4, %9 : vector<4x256xf32>
    %11 = math.exp %10 : vector<4x256xf32>
    %cst_6 = arith.constant dense<0.000000e+00> : vector<256xf32>
    %12 = vector.multi_reduction <add>, %11, %cst_6 [0] : vector<4x256xf32> to vector<256xf32>
    %13 = vector.shape_cast %12 : vector<256xf32> to vector<1x256xf32>
    %14 = tpu.reciprocal %13 {approx = true} : vector<1x256xf32> -> vector<1x256xf32>
    %15 = arith.mulf %13, %14 : vector<1x256xf32>
    %cst_7 = arith.constant 2.000000e+00 : f32
    %16 = vector.broadcast %cst_7 : f32 to vector<1x256xf32>
    %17 = arith.subf %16, %15 : vector<1x256xf32>
    %18 = arith.mulf %14, %17 : vector<1x256xf32>
    %19 = vector.broadcast %18 : vector<1x256xf32> to vector<4x256xf32>
    %20 = arith.mulf %11, %19 : vector<4x256xf32>
    %21 = tpu.iota {dimensions = array<i32: 0>} : vector<4x256xi32>
    %22 = vector.broadcast %6 : vector<1x256xi32> to vector<4x256xi32>
    %23 = arith.cmpi eq, %21, %22 : vector<4x256xi32>
    %c0_8 = arith.constant 0 : index
    %c0_9 = arith.constant 0 : index
    %24 = vector.load %arg5[%c0_8, %c0_9] : memref<4x128xf32, #tpu.memory_space<vmem>>, vector<4x128xf32>
    %cst_10 = arith.constant 0.000000e+00 : f32
    %25 = vector.broadcast %cst_10 : f32 to vector<4x256xf32>
    %26 = arith.select %23, %20, %25 : vector<4x256xi1>, vector<4x256xf32>
    %27 = vector.extract_strided_slice %26 {offsets = [0, 0], sizes = [4, 128], strides = [1, 1]} : vector<4x256xf32> to vector<4x128xf32>
    %28 = vector.extract_strided_slice %26 {offsets = [0, 128], sizes = [4, 128], strides = [1, 1]} : vector<4x256xf32> to vector<4x128xf32>
    %29 = arith.addf %27, %28 : vector<4x128xf32>
    %30 = arith.addf %24, %29 : vector<4x128xf32>
    %c0_11 = arith.constant 0 : index
    %c0_12 = arith.constant 0 : index
    %31 = vector.load %arg5[%c0_11, %c0_12] : memref<4x128xf32, #tpu.memory_space<vmem>>, vector<4x128xf32>
    tpu.vector_store %arg5[%c0_11, %c0_12], %30 {strides = array<i32>} : memref<4x128xf32, #tpu.memory_space<vmem>>, vector<4x128xf32>,
    %c0_13 = arith.constant 0 : index
    %c0_14 = arith.constant 0 : index
    %32 = vector.load %arg6[%c0_13, %c0_14] : memref<4x128xf32, #tpu.memory_space<vmem>>, vector<4x128xf32>
    %33 = vector.extract_strided_slice %20 {offsets = [0, 0], sizes = [4, 128], strides = [1, 1]} : vector<4x256xf32> to vector<4x128xf32>
    %34 = vector.extract_strided_slice %20 {offsets = [0, 128], sizes = [4, 128], strides = [1, 1]} : vector<4x256xf32> to vector<4x128xf32>
    %35 = arith.addf %33, %34 : vector<4x128xf32>
    %36 = arith.addf %32, %35 : vector<4x128xf32>
    %c0_15 = arith.constant 0 : index
    %c0_16 = arith.constant 0 : index
    %37 = vector.load %arg6[%c0_15, %c0_16] : memref<4x128xf32, #tpu.memory_space<vmem>>, vector<4x128xf32>
    tpu.vector_store %arg6[%c0_15, %c0_16], %36 {strides = array<i32>} : memref<4x128xf32, #tpu.memory_space<vmem>>, vector<4x128xf32>,
    %c0_17 = arith.constant 0 : index
    %c0_18 = arith.constant 0 : index
    %38 = vector.load %arg7[%c0_17, %c0_18] : memref<4x128xf32, #tpu.memory_space<vmem>>, vector<4x128xf32>
    %39 = arith.extui %23 : vector<4x256xi1> to vector<4x256xi32>
    %40 = arith.sitofp %39 : vector<4x256xi32> to vector<4x256xf32>
    %41 = vector.extract_strided_slice %40 {offsets = [0, 0], sizes = [4, 128], strides = [1, 1]} : vector<4x256xf32> to vector<4x128xf32>
    %42 = vector.extract_strided_slice %40 {offsets = [0, 128], sizes = [4, 128], strides = [1, 1]} : vector<4x256xf32> to vector<4x128xf32>
    %43 = arith.addf %41, %42 : vector<4x128xf32>
    %44 = arith.addf %38, %43 : vector<4x128xf32>
    %c0_19 = arith.constant 0 : index
    %c0_20 = arith.constant 0 : index
    %45 = vector.load %arg7[%c0_19, %c0_20] : memref<4x128xf32, #tpu.memory_space<vmem>>, vector<4x128xf32>
    tpu.vector_store %arg7[%c0_19, %c0_20], %44 {strides = array<i32>} : memref<4x128xf32, #tpu.memory_space<vmem>>, vector<4x128xf32>,
    %c0_i32_21 = arith.constant 0 : i32
    %46 = arith.cmpi eq, %arg1, %c0_i32_21 : i32
    %47 = arith.extui %46 : i1 to i32
    %c0_i32_22 = arith.constant 0 : i32
    %48 = arith.cmpi ne, %47, %c0_i32_22 : i32
    scf.if %48 {
      %c0_23 = arith.constant 0 : index
      %c0_24 = arith.constant 0 : index
      %49 = vector.load %arg5[%c0_23, %c0_24] : memref<4x128xf32, #tpu.memory_space<vmem>>, vector<4x128xf32>
      %cst_25 = arith.constant dense<0.000000e+00> : vector<4xf32>
      %50 = vector.multi_reduction <add>, %49, %cst_25 [1] : vector<4x128xf32> to vector<4xf32>
      %51 = vector.shape_cast %50 : vector<4xf32> to vector<4x1xf32>
      %c0_26 = arith.constant 0 : index
      %c0_27 = arith.constant 0 : index
      %52 = vector.load %arg6[%c0_26, %c0_27] : memref<4x128xf32, #tpu.memory_space<vmem>>, vector<4x128xf32>
      %cst_28 = arith.constant dense<0.000000e+00> : vector<4xf32>
      %53 = vector.multi_reduction <add>, %52, %cst_28 [1] : vector<4x128xf32> to vector<4xf32>
      %54 = vector.shape_cast %53 : vector<4xf32> to vector<4x1xf32>
      %c0_29 = arith.constant 0 : index
      %c0_30 = arith.constant 0 : index
      %55 = vector.load %arg7[%c0_29, %c0_30] : memref<4x128xf32, #tpu.memory_space<vmem>>, vector<4x128xf32>
      %cst_31 = arith.constant dense<0.000000e+00> : vector<4xf32>
      %56 = vector.multi_reduction <add>, %55, %cst_31 [1] : vector<4x128xf32> to vector<4xf32>
      %57 = vector.shape_cast %56 : vector<4xf32> to vector<4x1xf32>
      %cst_32 = arith.constant 2.000000e+00 : f32
      %58 = vector.broadcast %cst_32 : f32 to vector<4x1xf32>
      %59 = arith.mulf %58, %51 : vector<4x1xf32>
      %cst_33 = arith.constant 1.000000e+00 : f32
      %60 = vector.broadcast %cst_33 : f32 to vector<4x1xf32>
      %61 = arith.addf %59, %60 : vector<4x1xf32>
      %62 = arith.addf %54, %57 : vector<4x1xf32>
      %cst_34 = arith.constant 1.000000e+00 : f32
      %63 = vector.broadcast %cst_34 : f32 to vector<4x1xf32>
      %64 = arith.addf %62, %63 : vector<4x1xf32>
      %65 = arith.divf %61, %64 : vector<4x1xf32>
      %cst_35 = arith.constant dense<0.000000e+00> : vector<1xf32>
      %66 = vector.multi_reduction <add>, %65, %cst_35 [0] : vector<4x1xf32> to vector<1xf32>
      %67 = vector.shape_cast %66 : vector<1xf32> to vector<1x1xf32>
      %68 = vector.shape_cast %67 : vector<1x1xf32> to vector<1x1xf32>
      %69 = vector.broadcast %68 : vector<1x1xf32> to vector<1x128xf32>
      %c0_36 = arith.constant 0 : index
      %c0_37 = arith.constant 0 : index
      %70 = vector.load %arg4[%c0_36, %c0_37] : memref<1x128xf32, #tpu.memory_space<vmem>>, vector<1x128xf32>
      tpu.vector_store %arg4[%c0_36, %c0_37], %69 {strides = array<i32>} : memref<1x128xf32, #tpu.memory_space<vmem>>, vector<1x128xf32>,
    } else {
    }
    return
  }
  func.func @transform_0(%arg0: i32, %arg1: i32) -> (i32, i32, i32) {
    %c0_i32 = arith.constant 0 : i32
    %c0_i32_0 = arith.constant 0 : i32
    return %arg0, %c0_i32, %arg1 : i32, i32, i32
  }
  func.func @transform_1(%arg0: i32, %arg1: i32) -> (i32, i32, i32) {
    %c0_i32 = arith.constant 0 : i32
    %c0_i32_0 = arith.constant 0 : i32
    return %arg0, %c0_i32, %arg1 : i32, i32, i32
  }
  func.func @transform_2(%arg0: i32, %arg1: i32) -> (i32, i32) {
    %c0_i32 = arith.constant 0 : i32
    %c0_i32_0 = arith.constant 0 : i32
    return %c0_i32, %arg0 : i32, i32
  }
}

</mosaic_0001>

<llo_original>
// kernel: tpu_custom_call.1
$region0: #{tpu_custom_call.1}
  #allocation0 [shape = 'u32[]', space=smem, size = 0x4, offset = 0x4, fixed_abs, tag = 'smem constant byte address 0x4 - core index']
  #allocation1 [shape = 'u32[72,128]{1,0:T(1,128)}', space=vmem, size = 0x9000, scoped, tag = 'internal scratch']
  #allocation2 [shape = 'f32[4,128]{1,0:T(4,128)}', space=vmem, size = 0x800, scoped, tag = 'scratch operand']
  #allocation3 [shape = 'f32[4,128]{1,0:T(4,128)}', space=vmem, size = 0x800, scoped, tag = 'scratch operand']
  #allocation4 [shape = 'f32[4,128]{1,0:T(4,128)}', space=vmem, size = 0x800, scoped, tag = 'scratch operand']
  %s0 = inlined_call_operand.hbm [shape: f32[2,4,256], index: 0, kind: input, shape index: {}]
  %s1 = inlined_call_operand.hbm [shape: s32[2,1,256], index: 1, kind: input, shape index: {}]
  %s2 = inlined_call_operand.hbm [shape: f32[1,256], index: 2, kind: output, shape index: {}]
  %s3 = sld [smem:[#allocation0]]
  $region57: #{tpu_custom_call.1} parent=0
    _
  %s5 = ssub.s32 1, %s3
  %s6 = scalar_select 0, %s5, %s3
  $region1: #{tpu_custom_call.1} parent=0
    #allocation5 [shape = 'u8[8192]{0}', space=vmem, size = 0x2000, scoped, tag = 'input window, operand 0']
    #allocation6 [shape = 's32[2]{0}', space=sflag, size = 0x8, scoped, tag = 'scoped memory for tpu_custom_call.1']
    #allocation7 [shape = 's32[2]{0}', space=sflag, size = 0x8, scoped, tag = 'scoped memory for tpu_custom_call.1']
    #allocation8 [shape = 'u8[2048]{0}', space=vmem, size = 0x800, scoped, tag = 'input window, operand 1']
    #allocation9 [shape = 's32[2]{0}', space=sflag, size = 0x8, scoped, tag = 'scoped memory for tpu_custom_call.1']
    #allocation10 [shape = 'u8[1024]{0}', space=vmem, size = 0x400, scoped, tag = 'output window, operand 0']
    %7 = vsyncpa [#allocation6], 0
    %s8 = scalar_lea.sflag [#allocation6], 1
    %9 = vsyncpa %s8, 0
    %10 = vsyncpa [#allocation9], 0
    %s11 = scalar_lea.sflag [#allocation9], 1
    %12 = vsyncpa %s11, 0
    %13 = vsyncpa [#allocation7], 0
    %s14 = scalar_lea.sflag [#allocation7], 1
    %15 = vsyncpa %s14, 0
    loop: start=0, step=1, limit=4
    $region2: #{tpu_custom_call.1} parent=1 // loop_pre_header
      _
    $region3: #{tpu_custom_call.1} parent=1 // loop_header
      %s17 = sphi 0, %s21
      %p18 = scmp.ge.s32.totalorder %s17, 4
      %s24 = sphi 0, %s36
      %s25 = sphi 0, %s32
      %s26 = sphi 0, %s24
      %s27 = sphi 0, %s25
      %s28 = sphi 0, %s26
      %s29 = sphi 0, %s27
      %s41 = sphi 0, %s43
      %s44 = sphi 0, %s41
      %s45 = sphi 0, %s44
      %s61 = sphi 0, %s45
      %s69 = sphi 0, %s71
      %s72 = sphi 0, %s69
      %s73 = sphi 0, %s72
      %s89 = sphi 0, %s73
      %s95 = sphi 0, %s97
      %s98 = sphi 0, %s95
      %s99 = sphi 0, %s98
      %s115 = sphi 0, %s99
    $region4: #{tpu_custom_call.1} parent=1 // loop_header_branch
      %20 = sbr.rel (%p18) target = $region8
    $region5: #{tpu_custom_call.1} parent=1 // loop_body
      %s22 = ssub.s32 %s17, 1
      %s23 = ssub.s32 %s17, 2
      %s30 = sadd.s32 1, %s25
      %p31 = scmp.ge.s32.totalorder %s30, 1
      %s32 = scalar_select %p31, 0, %s30
      %s33 = sadd.s32 1, %s24
      %s34 = scalar_select %p31, %s33, %s24
      %p35 = scmp.ge.s32.totalorder %s34, 2
      %s36 = scalar_select %p35, 0, %s34
      %s37 = ssub.s32 %s24, %s36
      %s38 = ssub.s32 %s25, %s32
      %s39 = sor.u32 %s37, %s38
      %p40 = scmp.eq.s32.totalorder %s39, 0
      %s42 = sadd.s32 %s41, 1
      %s43 = scalar_select %p40, %s41, %s42
      %p46 = pneg %p40
      %p47 = scmp.eq.s32.totalorder %s17, 1
      %p48 = por %p46, %p47
      %p49 = scmp.ne.s32.totalorder %s41, %s44
      %p50 = scmp.eq.s32.totalorder %s17, 0
      %p51 = por %p49, %p50
      %p52 = scmp.ne.s32.totalorder %s41, %s44
      %p53 = scmp.eq.s32.totalorder %s22, 1
      %p54 = por %p52, %p53
      %p55 = scmp.ne.s32.totalorder %s44, %s45
      %p56 = scmp.eq.s32.totalorder %s22, 0
      %p57 = por %p55, %p56
      %p58 = scmp.ne.s32.totalorder %s44, %s45
      %p59 = scmp.eq.s32.totalorder %s23, 1
      %p60 = por %p58, %p59
      %p62 = scmp.ne.s32.totalorder %s45, %s61
      %p63 = scmp.eq.s32.totalorder %s23, 0
      %p64 = por %p62, %p63
      %s65 = ssub.s32 %s24, %s36
      %s66 = ssub.s32 %s25, %s32
      %s67 = sor.u32 %s65, %s66
      %p68 = scmp.eq.s32.totalorder %s67, 0
      %s70 = sadd.s32 %s69, 1
      %s71 = scalar_select %p68, %s69, %s70
      %p74 = pneg %p68
      %p75 = scmp.eq.s32.totalorder %s17, 1
      %p76 = por %p74, %p75
      %p77 = scmp.ne.s32.totalorder %s69, %s72
      %p78 = scmp.eq.s32.totalorder %s17, 0
      %p79 = por %p77, %p78
      %p80 = scmp.ne.s32.totalorder %s69, %s72
      %p81 = scmp.eq.s32.totalorder %s22, 1
      %p82 = por %p80, %p81
      %p83 = scmp.ne.s32.totalorder %s72, %s73
      %p84 = scmp.eq.s32.totalorder %s22, 0
      %p85 = por %p83, %p84
      %p86 = scmp.ne.s32.totalorder %s72, %s73
      %p87 = scmp.eq.s32.totalorder %s23, 1
      %p88 = por %p86, %p87
      %p90 = scmp.ne.s32.totalorder %s73, %s89
      %p91 = scmp.eq.s32.totalorder %s23, 0
      %p92 = por %p90, %p91
      %s93 = ssub.s32 %s24, %s36
      %p94 = scmp.eq.s32.totalorder %s93, 0
      %s96 = sadd.s32 %s95, 1
      %s97 = scalar_select %p94, %s95, %s96
      %p100 = pneg %p94
      %p101 = scmp.eq.s32.totalorder %s17, 1
      %p102 = por %p100, %p101
      %p103 = scmp.ne.s32.totalorder %s95, %s98
      %p104 = scmp.eq.s32.totalorder %s17, 0
      %p105 = por %p103, %p104
      %p106 = scmp.ne.s32.totalorder %s95, %s98
      %p107 = scmp.eq.s32.totalorder %s22, 1
      %p108 = por %p106, %p107
      %p109 = scmp.ne.s32.totalorder %s98, %s99
      %p110 = scmp.eq.s32.totalorder %s22, 0
      %p111 = por %p109, %p110
      %p112 = scmp.ne.s32.totalorder %s98, %s99
      %p113 = scmp.eq.s32.totalorder %s23, 1
      %p114 = por %p112, %p113
      %p116 = scmp.ne.s32.totalorder %s99, %s115
      %p117 = scmp.eq.s32.totalorder %s23, 0
      %p118 = por %p116, %p117
      %p119 = scmp.le.s32.totalorder 1, %s17
      %p120 = scmp.lt.s32.totalorder %s17, 3
      %p121 = pnand %p119, %p120
      %p122 = pneg %p121
      // Predicated region
      $region9: #{tpu_custom_call.1} parent=5 // pred_check
        _
      $region10: #{tpu_custom_call.1} parent=5 // pred_check_branch
        %124 = sbr.rel (%p121) target = $region12
      $region11: #{tpu_custom_call.1} parent=5 // pred_region
        %s125 = ssub.s32 %s17, 1
      $region12: #{tpu_custom_call.1} parent=5 // pred_fallthru
        _
      %p126 = scmp.lt.s32.totalorder %s17, 2
      // Predicated region
      $region13: #{tpu_custom_call.1} parent=5 // pred_check
        %p127 = pneg %p126
      $region14: #{tpu_custom_call.1} parent=5 // pred_check_branch
        %129 = sbr.rel (%p127) target = $region16
      $region15: #{tpu_custom_call.1} parent=5 // pred_region
        // Predicated region
        $region17: #{tpu_custom_call.1} parent=15 // pred_check
          %p130 = pneg %p51
        $region18: #{tpu_custom_call.1} parent=15 // pred_check_branch
          %132 = sbr.rel (%p130) target = $region20
        $region19: #{tpu_custom_call.1} parent=15 // pred_region
          %s133 = sand.u32 %s41, 1
          %s134 = scalar_lea.sflag [#allocation6], %s133
          %s135 = sand.u32 %s41, 1
          %s136 = smul.addr %s135, 8
          %s137 = scalar_lea.vmem [#allocation5], %s136
          %s138 = smul.u32 2, %s25
          %140 = vsyncadd %s134, 0
          %s141 = smul.addr %s24, 2
          %s142 = sadd.s32 %s138, %s141
          %s143 = smul.addr %s142, 4
          %s144 = scalar_lea.hbm %s0, %s143
          %s146 = sshll.u32 %s144, 4
          %s147 = int_to_ptr.hbm [resolvable:$true] %s146
          %s148 = sshll.u32 %s137, 4
          %s149 = int_to_ptr.vmem [resolvable:$true] %s148
          %151 = dma.hbm_to_vmem [thread:$0]  %s147, 128, %s149, %s134
        $region20: #{tpu_custom_call.1} parent=15 // pred_fallthru
          _
        // Predicated region
        $region21: #{tpu_custom_call.1} parent=15 // pred_check
          %p152 = pneg %p79
        $region22: #{tpu_custom_call.1} parent=15 // pred_check_branch
          %154 = sbr.rel (%p152) target = $region24
        $region23: #{tpu_custom_call.1} parent=15 // pred_region
          %s155 = sand.u32 %s69, 1
          %s156 = scalar_lea.sflag [#allocation9], %s155
          %s157 = sand.u32 %s69, 1
          %s158 = smul.addr %s157, 2
          %s159 = scalar_lea.vmem [#allocation8], %s158
          %s160 = smul.u32 2, %s25
          %162 = vsyncadd %s156, 0
          %s163 = smul.addr %s24, 2
          %s164 = sadd.s32 %s160, %s163
          %s165 = scalar_lea.hbm %s1, %s164
          %s167 = sshll.u32 %s165, 4
          %s168 = int_to_ptr.hbm [resolvable:$true] %s167
          %s169 = sshll.u32 %s159, 4
          %s170 = int_to_ptr.vmem [resolvable:$true] %s169
          %172 = dma.hbm_to_vmem [thread:$0]  %s168, 32, %s170, %s156
        $region24: #{tpu_custom_call.1} parent=15 // pred_fallthru
          _
      $region16: #{tpu_custom_call.1} parent=5 // pred_fallthru
        _
      %p173 = scmp.le.s32.totalorder 1, %s17
      %p174 = scmp.lt.s32.totalorder %s17, 3
      %p175 = pnand %p173, %p174
      %p176 = pneg %p175
      // Predicated region
      $region25: #{tpu_custom_call.1} parent=5 // pred_check
        _
      $region26: #{tpu_custom_call.1} parent=5 // pred_check_branch
        %178 = sbr.rel (%p175) target = $region28
      $region27: #{tpu_custom_call.1} parent=5 // pred_region
        %s179 = ssub.s32 %s17, 1
        %s180 = sand.u32 %s44, 1
        %s181 = scalar_lea.sflag [#allocation6], %s180
        %s182 = sand.u32 %s44, 1
        %s183 = smul.addr %s182, 8
        %s184 = scalar_lea.vmem [#allocation5], %s183
        // Predicated region
        $region29: #{tpu_custom_call.1} parent=27 // pred_check
          %p185 = pneg %p57
        $region30: #{tpu_custom_call.1} parent=27 // pred_check_branch
          %187 = sbr.rel (%p185) target = $region32
        $region31: #{tpu_custom_call.1} parent=27 // pred_region
          %189 = dma.done %s181, 128
        $region32: #{tpu_custom_call.1} parent=27 // pred_fallthru
          _
        %s190 = sand.u32 %s72, 1
        %s191 = scalar_lea.sflag [#allocation9], %s190
        %s192 = sand.u32 %s72, 1
        %s193 = smul.addr %s192, 2
        %s194 = scalar_lea.vmem [#allocation8], %s193
        // Predicated region
        $region33: #{tpu_custom_call.1} parent=27 // pred_check
          %p195 = pneg %p85
        $region34: #{tpu_custom_call.1} parent=27 // pred_check_branch
          %197 = sbr.rel (%p195) target = $region36
        $region35: #{tpu_custom_call.1} parent=27 // pred_region
          %199 = dma.done %s191, 32
        $region36: #{tpu_custom_call.1} parent=27 // pred_fallthru
          _
        %s200 = sand.u32 %s44, 1
        %s201 = scalar_lea.sflag [#allocation6], %s200
        %s202 = sand.u32 %s44, 1
        %s203 = smul.addr %s202, 8
        %s204 = scalar_lea.vmem [#allocation5], %s203
        %p205 = pneg %p57
        %p206 = pneg %p54
        %s207 = sand.u32 %s72, 1
        %s208 = scalar_lea.sflag [#allocation9], %s207
        %s209 = sand.u32 %s72, 1
        %s210 = smul.addr %s209, 2
        %s211 = scalar_lea.vmem [#allocation8], %s210
        %p212 = pneg %p85
        %p213 = pneg %p82
        %p214 = pneg %p111
        %p215 = pneg %p108
        %s216 = sand.u32 %s98, 1
        %s217 = scalar_lea.sflag [#allocation7], %s216
        %s218 = sand.u32 %s98, 1
        %s219 = scalar_lea.vmem [#allocation10], %s218
        %s220 = smul.u32 2, %s27
        %s221 = smul.u32 2, %s27
        %p222 = scmp.eq.s32.totalorder %s27, 0
        // Predicated region
        $region37: #{tpu_custom_call.1} parent=27 // pred_check
          %p223 = pneg %p222
        $region38: #{tpu_custom_call.1} parent=27 // pred_check_branch
          %225 = sbr.rel (%p223) target = $region40
        $region39: #{tpu_custom_call.1} parent=27 // pred_region
          %226 = vst [vmem:[#allocation2] sm:$0xf] 0.0
          %227 = vst [vmem:[#allocation3] sm:$0xf] 0.0
          %228 = vst [vmem:[#allocation4] sm:$0xf] 0.0
        $region40: #{tpu_custom_call.1} parent=27 // pred_fallthru
          _
        %v229 = vld [vmem:[%s184] sm:$0xff]
        %v230 = vld [vmem:[%s194] sm:$0x3]
        %232 = vst [vmem:[#allocation1] ss:$2 sm:$0xff] %v229
        %v233 = vld.sshfl [vmem:[#allocation1] sm:$0xff pattern:$0x75316420]
        %v234 = vld.sshfl [vmem:[#allocation1 + $0x8] sm:$0xff pattern:$0x75316420]
        %vm237 = vcmask 1043456
        %v238 = vsel %vm237, %v233, -inf
        %v239 = vrot.slane %v238, 4
        %v240 = vmax.f32 %v238, %v239
        %v241 = vrot.slane %v240, 2
        %v242 = vmax.f32 %v240, %v241
        %v243 = vrot.slane %v242, 1
        %v244 = vmax.f32 %v242, %v243
        %v245 = vsel %vm237, %v234, -inf
        %v246 = vrot.slane %v245, 4
        %v247 = vmax.f32 %v245, %v246
        %v248 = vrot.slane %v247, 2
        %v249 = vmax.f32 %v247, %v248
        %v250 = vrot.slane %v249, 1
        %v251 = vmax.f32 %v249, %v250
        %v254 = vrot.slane %v251, 4
        %v255 = vsel %vm237, %v244, %v254
        %v257 = vsub.f32 %v229, %v255
        %v258 = vmul.f32 %v257, 1.442695
        %v259 = vpow.pop %v258
        %261 = vst [vmem:[#allocation1] ss:$2 sm:$0xff] %v259
        %v262 = vld.sshfl [vmem:[#allocation1] sm:$0xff pattern:$0x75316420]
        %v263 = vld.sshfl [vmem:[#allocation1 + $0x8] sm:$0xff pattern:$0x75316420]
        %v266 = vsel %vm237, %v262, 0.0
        %v267 = vrot.slane %v266, 4
        %v268 = vadd.f32 %v266, %v267
        %v269 = vrot.slane %v268, 2
        %v270 = vadd.f32 %v268, %v269
        %v271 = vrot.slane %v270, 1
        %v272 = vadd.f32 %v270, %v271
        %v273 = vsel %vm237, %v263, 0.0
        %v274 = vrot.slane %v273, 4
        %v275 = vadd.f32 %v273, %v274
        %v276 = vrot.slane %v275, 2
        %v277 = vadd.f32 %v275, %v276
        %v278 = vrot.slane %v277, 1
        %v279 = vadd.f32 %v277, %v278
        %v280 = vrcp.pop %v272
        %v281 = vrcp.pop %v279
        %v282 = vmul.f32 %v272, %v280
        %v283 = vmul.f32 %v279, %v281
        %v284 = vsub.f32 2.0, %v282
        %v285 = vsub.f32 2.0, %v283
        %v286 = vmul.f32 %v280, %v284
        %v287 = vmul.f32 %v281, %v285
        %v290 = vrot.slane %v287, 4
        %v291 = vsel %vm237, %v286, %v290
        %v293 = vmul.f32 %v259, %v291
        %v294 = vlaneseq
        %v295 = vshrl.u32 %v294, 7
        %v296 = vperm.slane %v230, 0
        %v297 = vperm.slane %v230, 1
        %vm298 = vcmp.eq.s32.totalorder %v295, %v296
        %vm299 = vcmp.eq.s32.totalorder %v295, %v297
        %v300 = vld [vmem:[#allocation2] sm:$0xf]
        %302 = vst [vmem:[#allocation1] ss:$2 sm:$0xff] %v293
        %v303 = vld.sshfl [vmem:[#allocation1] sm:$0xff pattern:$0x75316420]
        %v304 = vld.sshfl [vmem:[#allocation1 + $0x8] sm:$0xff pattern:$0x75316420]
        %v307 = vsel %vm298, %v303, 0.0
        %v308 = vsel %vm299, %v304, 0.0
        %v309 = vadd.f32 %v307, %v308
        %v310 = vadd.f32 %v300, %v309
        %311 = vst [vmem:[#allocation2] sm:$0xf] %v310
        %v312 = vld [vmem:[#allocation3] sm:$0xf]
        %v313 = vrot.slane %v293, 4
        %v315 = vadd.f32 %v293, %v313
        %v316 = vadd.f32 %v312, %v315
        %317 = vst [vmem:[#allocation3] sm:$0xf] %v316
        %v318 = vld [vmem:[#allocation4] sm:$0xf]
        %v319 = vsel %vm298, 1, 0
        %v320 = vsel %vm299, 1, 0
        %v321 = vcvt.s32.f32 %v319
        %v322 = vcvt.s32.f32 %v320
        %v323 = vadd.f32 %v321, %v322
        %v324 = vadd.f32 %v318, %v323
        %325 = vst [vmem:[#allocation4] sm:$0xf] %v324
        // Predicated region
        $region41: #{tpu_custom_call.1} parent=27 // pred_check
          %p326 = pneg %p222
        $region42: #{tpu_custom_call.1} parent=27 // pred_check_branch
          %328 = sbr.rel (%p326) target = $region44
        $region43: #{tpu_custom_call.1} parent=27 // pred_region
          %v329 = vld [vmem:[#allocation2] sm:$0xf]
          %v330 = vsel %vm237, %v329, 0.0
          %331 = vadd.xlane.f32.xlu0 %v330
          %v332 = vpop.xlane.xlu0 %331
          %v333 = vld [vmem:[#allocation3] sm:$0xf]
          %v334 = vsel %vm237, %v333, 0.0
          %335 = vadd.xlane.f32.xlu0 %v334
          %v336 = vpop.xlane.xlu0 %335
          %v337 = vld [vmem:[#allocation4] sm:$0xf]
          %v338 = vsel %vm237, %v337, 0.0
          %339 = vadd.xlane.f32.xlu0 %v338
          %v340 = vpop.xlane.xlu0 %339
          %v341 = vmul.f32 %v332, 2.0
          %v342 = vadd.f32 %v341, 1.0
          %v343 = vadd.f32 %v336, %v340
          %v344 = vadd.f32 %v343, 1.0
          %v345 = vrcp.pop %v344
          %v346 = vmul.f32 %v344, %v345
          %v347 = vsub.f32 1.0, %v346
          %v348 = vmul.f32 %v345, %v347
          %v349 = vadd.f32 %v345, %v348
          %vm350 = vweird.f32 %v344
          %vm351 = vweird.f32 %v345
          %vm352 = vmor %vm350, %vm351
          %v353 = vsel %vm352, %v345, %v349
          %v354 = vand.u32 2147483647, %v344
          %vm355 = vcmp.eq.f32.partialorder %v354, 8.507059e+37
          %v356 = vand.u32 %v344, 2147483648
          %v357 = vor.u32 1.1754944e-38, %v356
          %v358 = vsel %vm355, %v357, %v353
          %v359 = vmul.f32 %v342, %v358
          %v360 = vsel %vm237, %v359, 0.0
          %v361 = vrot.slane %v360, 4
          %v362 = vadd.f32 %v360, %v361
          %v363 = vrot.slane %v362, 2
          %v364 = vadd.f32 %v362, %v363
          %v365 = vrot.slane %v364, 1
          %v366 = vadd.f32 %v364, %v365
          %367 = vst [vmem:[%s219] sm:$0x1] %v366
        $region44: #{tpu_custom_call.1} parent=27 // pred_fallthru
          _
        %s368 = sand.u32 %s98, 1
        %s369 = scalar_lea.sflag [#allocation7], %s368
        %s370 = sand.u32 %s98, 1
        %s371 = scalar_lea.vmem [#allocation10], %s370
        // Predicated region
        $region45: #{tpu_custom_call.1} parent=27 // pred_check
          %p372 = pneg %p108
        $region46: #{tpu_custom_call.1} parent=27 // pred_check_branch
          %374 = sbr.rel (%p372) target = $region48
        $region47: #{tpu_custom_call.1} parent=27 // pred_region
          %376 = vsyncadd %s369, 0
          %s377 = scalar_lea.hbm %s2, %s26
          %s379 = sshll.u32 %s371, 4
          %s380 = int_to_ptr.vmem [resolvable:$true] %s379
          %s381 = sshll.u32 %s377, 4
          %s382 = int_to_ptr.hbm [resolvable:$true] %s381
          %384 = dma.vmem_to_hbm [thread:$0]  %s380, 16, %s382, %s369
        $region48: #{tpu_custom_call.1} parent=27 // pred_fallthru
          _
      $region28: #{tpu_custom_call.1} parent=5 // pred_fallthru
        _
      %p385 = scmp.le.s32.totalorder 2, %s17
      // Predicated region
      $region49: #{tpu_custom_call.1} parent=5 // pred_check
        %p386 = pneg %p385
      $region50: #{tpu_custom_call.1} parent=5 // pred_check_branch
        %388 = sbr.rel (%p386) target = $region52
      $region51: #{tpu_custom_call.1} parent=5 // pred_region
        %s389 = ssub.s32 %s17, 2
        // Predicated region
        $region53: #{tpu_custom_call.1} parent=51 // pred_check
          %p390 = pneg %p114
        $region54: #{tpu_custom_call.1} parent=51 // pred_check_branch
          %392 = sbr.rel (%p390) target = $region56
        $region55: #{tpu_custom_call.1} parent=51 // pred_region
          %s393 = sand.u32 %s99, 1
          %s394 = scalar_lea.sflag [#allocation7], %s393
          %s395 = sand.u32 %s99, 1
          %s396 = scalar_lea.vmem [#allocation10], %s395
          %398 = dma.done %s394, 16
        $region56: #{tpu_custom_call.1} parent=51 // pred_fallthru
          _
      $region52: #{tpu_custom_call.1} parent=5 // pred_fallthru
        _
    $region6: #{tpu_custom_call.1} parent=1 // loop_footer
      %s21 = sadd.s32 1, %s17
    $region7: #{tpu_custom_call.1} parent=1 // loop_footer_branch
      %16 = sbr.rel target = $region3
    $region8: #{tpu_custom_call.1} parent=1 // loop_exit
      _
    %399 = vsyncpa [#allocation6], 1
    %s400 = scalar_lea.sflag [#allocation6], 1
    %401 = vsyncpa %s400, 1
    %402 = vsyncpa [#allocation9], 1
    %s403 = scalar_lea.sflag [#allocation9], 1
    %404 = vsyncpa %s403, 1
    %405 = vsyncpa [#allocation7], 1
    %s406 = scalar_lea.sflag [#allocation7], 1
    %407 = vsyncpa %s406, 1

</llo_original>
